<compile_context>
chip_gen: v7x
topology: tpu7x:2x2x1
jax: 0.10.0
libtpu: 0.0.40
codegen_flags: <defaults>
</compile_context>

<pallas_src>
import jax
import jax.numpy as jnp
from jax.experimental import pallas as pl
from jax.experimental.pallas import tpu as pltpu

K = 4            # feature dim of x / rows of w
PACK = 128 // K  # 32 logical rows packed per 128-lane line


def packed_rowsum_kernel(xr_ref, comb_ref, o_ref):
    """xr_ref: VMEM (TR, 128) packed x; comb_ref: VMEM (128, 32); o_ref: VMEM (TR, 32).

    o[r, g] = sum_k x[32*r_global + g, k] * w[k]  (one MXU dot, f32 accumulate).
    """
    o_ref[...] = jnp.dot(
        xr_ref[...], comb_ref[...], preferred_element_type=jnp.float32
    ).astype(o_ref.dtype)


@jax.jit
def mynn_forward(x, w):
    """x: (M, K) f32, w: (K, 1) f32  ->  (M, 1) f32, same as torch.mm(x, w)."""
    M, k = x.shape
    kw, n = w.shape
    assert k == K and kw == K and n == 1

    # --- layout plumbing (free contiguous reshapes; pad only the <32-row tail) ---
    M32 = ((M + PACK - 1) // PACK) * PACK
    if M32 != M:
        x = jnp.pad(x, ((0, M32 - M), (0, 0)))  # tiny unless M is huge AND ragged
    R = M32 // PACK
    xr = x.reshape(R, K * PACK)  # (R, 128): bitcast, no data movement

    # Comb matrix folding w + group-of-4 lane reduction: C[l, g] = w[l%4] * (l//4 == g)
    eye = jnp.eye(PACK, dtype=x.dtype)                                   # (32, 32)
    comb = (eye[:, None, :] * w.reshape(1, K, 1)).reshape(K * PACK, PACK)  # (128, 32)

    # --- tiling: ~4 MiB x tiles, but keep >= 2-8 grid steps for v7x megacore ---
    TR_MAX = 8192  # 8192 * 128 * 4 B = 4 MiB per x tile
    if R <= 8:
        TR = R  # full-extent block (second-last dim == array dim)
    else:
        TR = min(TR_MAX, ((pl.cdiv(R, 8) + 7) // 8) * 8)  # multiple of 8, >= 8
    grid = (pl.cdiv(R, TR),)

    out = pl.pallas_call(
        packed_rowsum_kernel,
        out_shape=jax.ShapeDtypeStruct((R, PACK), x.dtype),
        grid_spec=pltpu.PrefetchScalarGridSpec(
            num_scalar_prefetch=0,
            grid=grid,
            in_specs=[
                # Packed x tile: (TR, 128), streamed/double-buffered along R.
                pl.BlockSpec((TR, K * PACK), lambda i: (i, 0)),
                # Comb matrix: tiny, same block every step -> stays resident in VMEM.
                pl.BlockSpec((K * PACK, PACK), lambda i: (0, 0)),
            ],
            # Lane-dense output tile (last dim = full extent 32), per-tile writes only.
            out_specs=pl.BlockSpec((TR, PACK), lambda i: (i, 0)),
        ),
        compiler_params=pltpu.CompilerParams(
            # Independent M tiles: shard across TensorCores on v7x (no-op on v5e/v6e).
            dimension_semantics=("parallel",),
        ),
        cost_estimate=pl.CostEstimate(
            flops=2 * R * (K * PACK) * PACK,
            transcendentals=0,
            bytes_accessed=(R * K * PACK + R * PACK + K * PACK * PACK) * 4,
        ),
    )(xr, comb)

    # Back to torch.mm output shape (M, 1); slice drops pad / ragged-block garbage.
    return out.reshape(M32)[:M].reshape(M, 1)


if __name__ == "__main__":
    key = jax.random.PRNGKey(0)
    # forward implies x: (batch, 4) since w is (4, 1)
    x = jax.random.normal(key, (8, 4), dtype=jnp.float32)
    w = jnp.ones((4, 1), dtype=jnp.float32)  # matches torch.ones((4, 1))

    out = mynn_forward(x, w)
    jax.block_until_ready(out)

    ref = x @ w
    assert out.shape == (8, 1)
    assert jnp.allclose(out, ref, atol=1e-5, rtol=1e-5), "mismatch vs reference"
    print("KERNEL_OK")
</pallas_src>

<mosaic_0001>
module attributes {stable_mosaic.version = 11 : i64} {
  func.func @packed_rowsum_kernel(%arg0: i32, %arg1: memref<1x128xf32, #tpu.memory_space<vmem>>, %arg2: memref<128x32xf32, #tpu.memory_space<vmem>>, %arg3: memref<1x32xf32, #tpu.memory_space<vmem>>) attributes {dimension_semantics = [#tpu.dimension_semantics<parallel>], iteration_bounds = array<i64: 1>, scalar_prefetch = 0 : i64, scratch_operands = 0 : i64, tpu.core_type = #tpu.core_type<tc>, window_params = [{transform_indices = @transform_0, window_bounds = array<i64: 1, 128>}, {pipeline_mode = #tpu.pipeline_mode<synchronous>, transform_indices = @transform_1, window_bounds = array<i64: 128, 32>}, {transform_indices = @transform_2, window_bounds = array<i64: 1, 32>}]} {
    %c0 = arith.constant 0 : index
    %c0_0 = arith.constant 0 : index
    %0 = vector.load %arg1[%c0, %c0_0] : memref<1x128xf32, #tpu.memory_space<vmem>>, vector<1x128xf32>
    %c0_1 = arith.constant 0 : index
    %c0_2 = arith.constant 0 : index
    %1 = vector.load %arg2[%c0_1, %c0_2] : memref<128x32xf32, #tpu.memory_space<vmem>>, vector<128x32xf32>
    %cst = arith.constant dense<0.000000e+00> : vector<1x32xf32>
    %2 = tpu.matmul %0, %1, %cst {dimension_numbers = #tpu.dot_dimension_numbers<[1], [0], [0], [1], [0, 0, 1, 1], [], []>} : vector<1x128xf32>, vector<128x32xf32>, vector<1x32xf32> -> vector<1x32xf32>
    %c0_3 = arith.constant 0 : index
    %c0_4 = arith.constant 0 : index
    %3 = vector.load %arg3[%c0_3, %c0_4] : memref<1x32xf32, #tpu.memory_space<vmem>>, vector<1x32xf32>
    tpu.vector_store %arg3[%c0_3, %c0_4], %2 {strides = array<i32>} : memref<1x32xf32, #tpu.memory_space<vmem>>, vector<1x32xf32>,
    return
  }
  func.func @transform_0(%arg0: i32) -> (i32, i32) {
    %c0_i32 = arith.constant 0 : i32
    %c0_i32_0 = arith.constant 0 : i32
    return %arg0, %c0_i32 : i32, i32
  }
  func.func @transform_1(%arg0: i32) -> (i32, i32) {
    %c0_i32 = arith.constant 0 : i32
    %c0_i32_0 = arith.constant 0 : i32
    %c0_i32_1 = arith.constant 0 : i32
    return %c0_i32, %c0_i32_0 : i32, i32
  }
  func.func @transform_2(%arg0: i32) -> (i32, i32) {
    %c0_i32 = arith.constant 0 : i32
    %c0_i32_0 = arith.constant 0 : i32
    return %arg0, %c0_i32 : i32, i32
  }
}

</mosaic_0001>

<llo_original>
// kernel: mynn_forward.1
$region0: #{mynn_forward.1}
  #allocation0 [shape = 'u32[]', space=smem, size = 0x4, offset = 0x4, fixed_abs, tag = 'smem constant byte address 0x4 - core index']
  #allocation1 [shape = 'u32[144,128]{1,0:T(1,128)}', space=vmem, size = 0x12000, scoped, tag = 'internal scratch']
  %s0 = inlined_call_operand.vmem [shape: f32[1,128], index: 0, kind: input, shape index: {}]
  %s1 = inlined_call_operand.vmem [shape: f32[128,32], index: 1, kind: input, shape index: {}]
  %s2 = inlined_call_operand.vmem [shape: f32[1,32], index: 2, kind: output, shape index: {}]
  %s3 = sld [smem:[#allocation0]]
  $region18: #{mynn_forward.1} parent=0
    _
  %s5 = ssub.s32 1, %s3
  %s6 = scalar_select 0, %s5, %s3
  // Predicated region
  $region2: #{mynn_forward.1} parent=0 // pred_check
    _
  $region3: #{mynn_forward.1} parent=0 // pred_check_branch
    %8 = sbr.rel (0) target = $region5
  $region4: #{mynn_forward.1} parent=0 // pred_region
    _
  $region5: #{mynn_forward.1} parent=0 // pred_fallthru
    _
  // Predicated region
  $region6: #{mynn_forward.1} parent=0 // pred_check
    _
  $region7: #{mynn_forward.1} parent=0 // pred_check_branch
    %10 = sbr.rel (0) target = $region9
  $region8: #{mynn_forward.1} parent=0 // pred_region
    _
  $region9: #{mynn_forward.1} parent=0 // pred_fallthru
    _
  %v11 = vld [vmem:[%s0] sm:$0x1]
  %v12 = vld [vmem:[%s1] sm:$0xff]
  %v13 = vld [vmem:[%s1 + $0x8] sm:$0xff]
  %v14 = vld [vmem:[%s1 + $0x10] sm:$0xff]
  %v15 = vld [vmem:[%s1 + $0x18] sm:$0xff]
  %v16 = vld [vmem:[%s1 + $0x20] sm:$0xff]
  %v17 = vld [vmem:[%s1 + $0x28] sm:$0xff]
  %v18 = vld [vmem:[%s1 + $0x30] sm:$0xff]
  %v19 = vld [vmem:[%s1 + $0x38] sm:$0xff]
  %v20 = vld [vmem:[%s1 + $0x40] sm:$0xff]
  %v21 = vld [vmem:[%s1 + $0x48] sm:$0xff]
  %v22 = vld [vmem:[%s1 + $0x50] sm:$0xff]
  %v23 = vld [vmem:[%s1 + $0x58] sm:$0xff]
  %v24 = vld [vmem:[%s1 + $0x60] sm:$0xff]
  %v25 = vld [vmem:[%s1 + $0x68] sm:$0xff]
  %v26 = vld [vmem:[%s1 + $0x70] sm:$0xff]
  %v27 = vld [vmem:[%s1 + $0x78] sm:$0xff]
  %28 = vmatprep.subr.mxu0 0.0
  %29 = vmatpush1.msra.mxu0 %v12
  %30 = vmatprep.subr.mxu0 0.0
  %31 = vmatpush1.msra.mxu0 %v13
  %32 = vmatprep.subr.mxu0 0.0
  %33 = vmatpush1.msra.mxu0 %v14
  %34 = vmatprep.subr.mxu0 0.0
  %35 = vmatpush1.msra.mxu0 %v15
  %36 = vmatprep.subr.mxu0 0.0
  %37 = vmatpush1.msra.mxu0 %v16
  %38 = vmatprep.subr.mxu0 0.0
  %39 = vmatpush1.msra.mxu0 %v17
  %40 = vmatprep.subr.mxu0 0.0
  %41 = vmatpush1.msra.mxu0 %v18
  %42 = vmatprep.subr.mxu0 0.0
  %43 = vmatpush1.msra.mxu0 %v19
  %44 = vmatprep.subr.mxu0 0.0
  %45 = vmatpush1.msra.mxu0 %v20
  %46 = vmatprep.subr.mxu0 0.0
  %47 = vmatpush1.msra.mxu0 %v21
  %48 = vmatprep.subr.mxu0 0.0
  %49 = vmatpush1.msra.mxu0 %v22
  %50 = vmatprep.subr.mxu0 0.0
  %51 = vmatpush1.msra.mxu0 %v23
  %52 = vmatprep.subr.mxu0 0.0
  %53 = vmatpush1.msra.mxu0 %v24
  %54 = vmatprep.subr.mxu0 0.0
  %55 = vmatpush1.msra.mxu0 %v25
  %56 = vmatprep.subr.mxu0 0.0
  %57 = vmatpush1.msra.mxu0 %v26
  %58 = vmatprep.subr.mxu0 0.0
  %59 = vmatpush1.msra.mxu0 %v27
  %60 = vmatprep.subr.mxu0 0.0
  %61 = vmatpush1.msra.mxu0 0.0
  %62 = vmatprep.subr.mxu0 0.0
  %63 = vmatpush1.msra.mxu0 0.0
  %64 = vmatprep.subr.mxu0 0.0
  %65 = vmatpush1.msra.mxu0 0.0
  %66 = vmatprep.subr.mxu0 0.0
  %67 = vmatpush1.msra.mxu0 0.0
  %68 = vmatprep.subr.mxu0 0.0
  %69 = vmatpush1.msra.mxu0 0.0
  %70 = vmatprep.subr.mxu0 0.0
  %71 = vmatpush1.msra.mxu0 0.0
  %72 = vmatprep.subr.mxu0 0.0
  %73 = vmatpush1.msra.mxu0 0.0
  %74 = vmatprep.subr.mxu0 0.0
  %75 = vmatpush1.msra.mxu0 0.0
  %76 = vmatprep.subr.mxu0 0.0
  %77 = vmatpush1.msra.mxu0 0.0
  %78 = vmatprep.subr.mxu0 0.0
  %79 = vmatpush1.msra.mxu0 0.0
  %80 = vmatprep.subr.mxu0 0.0
  %81 = vmatpush1.msra.mxu0 0.0
  %82 = vmatprep.subr.mxu0 0.0
  %83 = vmatpush1.msra.mxu0 0.0
  %84 = vmatprep.subr.mxu0 0.0
  %85 = vmatpush1.msra.mxu0 0.0
  %86 = vmatprep.subr.mxu0 0.0
  %87 = vmatpush1.msra.mxu0 0.0
  %88 = vmatprep.subr.mxu0 0.0
  %89 = vmatpush1.msra.mxu0 0.0
  %90 = vmatprep.subr.mxu0 0.0
  %91 = vmatpush1.msra.mxu0 0.0
  %92 = vmatprep.mubr.f32.mxu0 0.0
  %93 = vmatmul.mubr.f32.gmra.mrb[0].mxu0 %v11
  %v94 = vpop.f32.mrb[0].mxu0
  %v95 = vadd.f32 0.0, %v94
  %v96 = vpop.f32.mrb[0].mxu0
  %97 = vdwg.mxu0
  %vm98 = vcmask 253952
  %99 = vst.msk [vmem:[%s2] sm:$0x1] %vm98, %v95
  // Predicated region
  $region10: #{mynn_forward.1} parent=0 // pred_check
    _
  $region11: #{mynn_forward.1} parent=0 // pred_check_branch
    %101 = sbr.rel (0) target = $region13
  $region12: #{mynn_forward.1} parent=0 // pred_region
    _
  $region13: #{mynn_forward.1} parent=0 // pred_fallthru
    _
  // Predicated region
  $region14: #{mynn_forward.1} parent=0 // pred_check
    _
  $region15: #{mynn_forward.1} parent=0 // pred_check_branch
    %103 = sbr.rel (0) target = $region17
  $region16: #{mynn_forward.1} parent=0 // pred_region
    _
  $region17: #{mynn_forward.1} parent=0 // pred_fallthru
    _

</llo_original>
